<compile_context>
chip_gen: v5e
topology: v5e:2x2
jax: 0.10.0
libtpu: 0.0.40
codegen_flags: <defaults>
</compile_context>

<pallas_src>
import functools

import jax
import jax.numpy as jnp
from jax.experimental import pallas as pl
from jax.experimental.pallas import tpu as pltpu


def _split_linear_kernel(x_ref, w_ref, *rest, scale, has_bias):
    """x_ref: (tr, K)   w_ref: (K, tn)   [b_ref: (1, tn)]   o_ref: (tr, tn) or (1, tr, tn)."""
    if has_bias:
        b_ref, o_ref = rest
    else:
        (o_ref,) = rest

    # Plain NN matmul on the MXU, f32 accumulation (weight already transposed wrapper-side,
    # so no in-kernel transpose is needed).
    y = jnp.dot(x_ref[...], w_ref[...], preferred_element_type=jnp.float32)
    if has_bias:
        y = y + b_ref[...].astype(jnp.float32)       # (1, tn) broadcast over rows
    if scale != 1.0:
        y = y * jnp.float32(scale)                   # == x @ (W*scale)^T + b*scale
    # o_ref may carry a leading size-1 head dim (direct split layout); the reshape is free
    # (last two dims unchanged -> no tile-boundary crossing).
    o_ref[...] = y.reshape(o_ref.shape).astype(o_ref.dtype)


def split_linear(x, weight, bias, num_splits, scale=1.0, transpose=False,
                 row_tile=256, n_tile=512, compute_dtype=None):
    """Pallas implementation of SplitLinear.forward.

    x:      (1, R, in_features)
    weight: (out_features, in_features)   (raw, un-scaled)
    bias:   (out_features,) or None       (raw, un-scaled)
    compute_dtype: optional dtype (e.g. jnp.bfloat16) for the matmul operands.
    """
    out_f, in_f = weight.shape
    assert out_f % num_splits == 0
    n_split = out_f // num_splits

    assert x.ndim == 3 and x.shape[0] == 1, "expects x of shape (1, R, in_features)"
    x2 = x[0]                               # (R, K)
    R = x2.shape[0]
    out_dtype = x.dtype

    # One-time wrapper-side transpose -> kernel contracts ((1,),(0,)).
    wT = weight.T                           # (in_f, out_f)
    if compute_dtype is not None:
        x2 = x2.astype(compute_dtype)
        wT = wT.astype(compute_dtype)

    has_bias = bias is not None

    # ---- Tile sizes. Last two dims of a block must be multiples of (8, 128) or equal the
    #      full array dims; boundary (ragged) blocks are padded on read / clipped on write.
    tr = R if R <= row_tile else max((row_tile // 8) * 8, 8)

    direct_split = (n_split % 128 == 0)     # per-head output is lane-dense -> write split layout
    if direct_split:
        tn = n_split
        if n_split > n_tile:
            tn = 128
            for cand in range((n_tile // 128) * 128, 127, -128):
                if n_split % cand == 0:
                    tn = cand
                    break
    else:
        tn = out_f if out_f <= n_tile else max((n_tile // 128) * 128, 128)

    isz_x = jnp.dtype(x2.dtype).itemsize
    isz_w = jnp.dtype(wT.dtype).itemsize
    isz_o = jnp.dtype(out_dtype).itemsize
    isz_b = jnp.dtype(bias.dtype).itemsize if has_bias else 0

    in_arrays = [x2, wT]
    if direct_split:
        n_blocks = n_split // tn            # N sub-blocks per split
        grid = (num_splits, pl.cdiv(R, tr), n_blocks)
        in_specs = [
            pl.BlockSpec((tr, in_f), lambda s, r, n: (r, 0)),
            pl.BlockSpec((in_f, tn), lambda s, r, n: (0, s * n_blocks + n)),
        ]
        if has_bias:
            in_arrays.append(bias.reshape(1, out_f))
            in_specs.append(pl.BlockSpec((1, tn), lambda s, r, n: (0, s * n_blocks + n)))
        out_shape = jax.ShapeDtypeStruct((num_splits, R, n_split), out_dtype)
        out_specs = pl.BlockSpec((1, tr, tn), lambda s, r, n: (s, r, n))
        dim_sem = ("parallel", "parallel", "parallel")
    else:
        grid = (pl.cdiv(R, tr), pl.cdiv(out_f, tn))
        in_specs = [
            pl.BlockSpec((tr, in_f), lambda r, n: (r, 0)),   # x resident across inner N loop
            pl.BlockSpec((in_f, tn), lambda r, n: (0, n)),   # weight streamed in N tiles
        ]
        if has_bias:
            in_arrays.append(bias.reshape(1, out_f))
            in_specs.append(pl.BlockSpec((1, tn), lambda r, n: (0, n)))
        out_shape = jax.ShapeDtypeStruct((R, out_f), out_dtype)
        out_specs = pl.BlockSpec((tr, tn), lambda r, n: (r, n))   # lane-dense output
        dim_sem = ("parallel", "parallel")

    # Double-buffered tile footprint (+ headroom), capped at 64 MiB so it is v7x-safe.
    # Note: for a fully-resident weight (single N block) pipeline_mode=pl.Buffered(1) would
    # halve the weight's VMEM; left at default double-buffering for lowering robustness.
    tile_bytes = 2 * (tr * in_f * isz_x + in_f * tn * isz_w + tr * tn * isz_o
                      + (tn * isz_b if has_bias else 0))
    vmem_limit = int(min(max(tile_bytes + (8 << 20), 32 << 20), 64 << 20))

    cost = pl.CostEstimate(
        flops=2 * R * in_f * out_f,
        transcendentals=0,
        bytes_accessed=(R * in_f * isz_x + in_f * out_f * isz_w
                        + (out_f * isz_b if has_bias else 0) + R * out_f * isz_o),
    )

    kernel = functools.partial(_split_linear_kernel,
                               scale=float(scale), has_bias=has_bias)

    y = pl.pallas_call(
        kernel,
        out_shape=out_shape,
        grid=grid,
        in_specs=in_specs,
        out_specs=out_specs,
        compiler_params=pltpu.CompilerParams(
            dimension_semantics=dim_sem,
            vmem_limit_bytes=vmem_limit,
        ),
        cost_estimate=cost,
    )(*in_arrays)

    if direct_split:
        out = y                                              # already (S, R, n_split)
        if transpose:
            out = jnp.swapaxes(out, -1, -2)                  # (S, n_split, R)
    else:
        y3 = y.reshape(R, num_splits, n_split)
        # Single fused layout pass: (R,S,n) -> (S,R,n) or (S,n,R).
        out = jnp.transpose(y3, (1, 2, 0) if transpose else (1, 0, 2))
    return out


if __name__ == "__main__":
    def reference(x, weight, bias, num_splits, scale, transpose):
        out_f, in_f = weight.shape
        n = out_f // num_splits
        w = weight.reshape(num_splits, n, in_f) * scale
        y = jnp.einsum("rk,snk->srn", x[0], w, precision="highest")
        if bias is not None:
            y = y + (bias.reshape(num_splits, n) * scale)[:, None, :]
        if transpose:
            y = jnp.swapaxes(y, -1, -2)
        return y

    # --- Case 1: Whisper-like small head_dim (< 128) -> fused layout + wrapper transpose.
    num_splits, in_f, out_f, rows, scale = 4, 32, 32, 8, 0.5
    k1, k2, k3 = jax.random.split(jax.random.PRNGKey(0), 3)
    weight = jax.random.normal(k1, (out_f, in_f), jnp.float32)
    bias = jax.random.normal(k2, (out_f,), jnp.float32)
    x = jax.random.normal(k3, (1, rows, in_f), jnp.float32)

    out = jax.block_until_ready(split_linear(x, weight, bias, num_splits, scale=scale))
    out_t = jax.block_until_ready(
        split_linear(x, weight, bias, num_splits, scale=scale, transpose=True))
    out_nb = jax.block_until_ready(split_linear(x, weight, None, num_splits, scale=scale))
    assert out.shape == (num_splits, rows, out_f // num_splits)
    assert out_t.shape == (num_splits, out_f // num_splits, rows)
    assert jnp.allclose(out, reference(x, weight, bias, num_splits, scale, False),
                        atol=2e-3, rtol=2e-3), "case1 mismatch"
    assert jnp.allclose(out_t, reference(x, weight, bias, num_splits, scale, True),
                        atol=2e-3, rtol=2e-3), "case1 transpose mismatch"
    assert jnp.allclose(out_nb, reference(x, weight, None, num_splits, scale, False),
                        atol=2e-3, rtol=2e-3), "case1 no-bias mismatch"

    # --- Case 2: ragged R (> row_tile) + N-tiled weight streaming (fused layout).
    num_splits, in_f, out_f, rows, scale = 4, 128, 256, 300, 1.25
    k1, k2, k3 = jax.random.split(jax.random.PRNGKey(1), 3)
    weight = jax.random.normal(k1, (out_f, in_f), jnp.float32) / jnp.sqrt(in_f)
    bias = jax.random.normal(k2, (out_f,), jnp.float32)
    x = jax.random.normal(k3, (1, rows, in_f), jnp.float32)
    out2 = jax.block_until_ready(
        split_linear(x, weight, bias, num_splits, scale=scale, row_tile=256, n_tile=128))
    assert out2.shape == (num_splits, rows, out_f // num_splits)
    assert jnp.allclose(out2, reference(x, weight, bias, num_splits, scale, False),
                        atol=2e-3, rtol=2e-3), "case2 (ragged R / N-tiled) mismatch"

    # --- Case 3: lane-dense per-head output (n_split % 128 == 0) -> direct split layout.
    num_splits, in_f, out_f, rows, scale = 2, 64, 512, 16, 0.75
    k1, k2, k3 = jax.random.split(jax.random.PRNGKey(2), 3)
    weight = jax.random.normal(k1, (out_f, in_f), jnp.float32) / jnp.sqrt(in_f)
    bias = jax.random.normal(k2, (out_f,), jnp.float32)
    x = jax.random.normal(k3, (1, rows, in_f), jnp.float32)
    out3 = jax.block_until_ready(split_linear(x, weight, bias, num_splits, scale=scale))
    out3_t = jax.block_until_ready(
        split_linear(x, weight, bias, num_splits, scale=scale, transpose=True))
    assert out3.shape == (num_splits, rows, out_f // num_splits)
    assert out3_t.shape == (num_splits, out_f // num_splits, rows)
    assert jnp.allclose(out3, reference(x, weight, bias, num_splits, scale, False),
                        atol=2e-3, rtol=2e-3), "case3 direct-split mismatch"
    assert jnp.allclose(out3_t, reference(x, weight, bias, num_splits, scale, True),
                        atol=2e-3, rtol=2e-3), "case3 direct-split transpose mismatch"

    # --- Case 4: bf16 operands (halved weight HBM bytes), f32 accumulation in-kernel.
    out4 = jax.block_until_ready(
        split_linear(x, weight, bias, num_splits, scale=scale,
                     compute_dtype=jnp.bfloat16))
    assert jnp.allclose(out4, reference(x, weight, bias, num_splits, scale, False),
                        atol=2e-1, rtol=5e-2), "case4 bf16 mismatch"

    print("KERNEL_OK")
</pallas_src>

<mosaic_0001>
module attributes {stable_mosaic.version = 11 : i64} {
  func.func @_split_linear_kernel(%arg0: i32, %arg1: i32, %arg2: memref<8x32xf32, #tpu.memory_space<vmem>>, %arg3: memref<32x32xf32, #tpu.memory_space<vmem>>, %arg4: memref<1x32xf32, #tpu.memory_space<vmem>>, %arg5: memref<8x32xf32, #tpu.memory_space<vmem>>) attributes {dimension_semantics = [#tpu.dimension_semantics<parallel>, #tpu.dimension_semantics<parallel>], iteration_bounds = array<i64: 1, 1>, scalar_prefetch = 0 : i64, scratch_operands = 0 : i64, tpu.core_type = #tpu.core_type<tc>, window_params = [{transform_indices = @transform_0, window_bounds = array<i64: 8, 32>}, {transform_indices = @transform_1, window_bounds = array<i64: 32, 32>}, {transform_indices = @transform_2, window_bounds = array<i64: 1, 32>}, {transform_indices = @transform_3, window_bounds = array<i64: 8, 32>}]} {
    %c0 = arith.constant 0 : index
    %c0_0 = arith.constant 0 : index
    %0 = vector.load %arg2[%c0, %c0_0] : memref<8x32xf32, #tpu.memory_space<vmem>>, vector<8x32xf32>
    %c0_1 = arith.constant 0 : index
    %c0_2 = arith.constant 0 : index
    %1 = vector.load %arg3[%c0_1, %c0_2] : memref<32x32xf32, #tpu.memory_space<vmem>>, vector<32x32xf32>
    %cst = arith.constant dense<0.000000e+00> : vector<8x32xf32>
    %2 = tpu.matmul %0, %1, %cst {dimension_numbers = #tpu.dot_dimension_numbers<[1], [0], [0], [1], [0, 0, 1, 1], [], []>} : vector<8x32xf32>, vector<32x32xf32>, vector<8x32xf32> -> vector<8x32xf32>
    %c0_3 = arith.constant 0 : index
    %c0_4 = arith.constant 0 : index
    %3 = vector.load %arg4[%c0_3, %c0_4] : memref<1x32xf32, #tpu.memory_space<vmem>>, vector<1x32xf32>
    %4 = vector.broadcast %3 : vector<1x32xf32> to vector<8x32xf32>
    %5 = arith.addf %2, %4 : vector<8x32xf32>
    %cst_5 = arith.constant 5.000000e-01 : f32
    %6 = vector.broadcast %cst_5 : f32 to vector<8x32xf32>
    %7 = arith.mulf %5, %6 : vector<8x32xf32>
    %c0_6 = arith.constant 0 : index
    %c0_7 = arith.constant 0 : index
    %8 = vector.load %arg5[%c0_6, %c0_7] : memref<8x32xf32, #tpu.memory_space<vmem>>, vector<8x32xf32>
    tpu.vector_store %arg5[%c0_6, %c0_7], %7 {strides = array<i32>} : memref<8x32xf32, #tpu.memory_space<vmem>>, vector<8x32xf32>,
    return
  }
  func.func @transform_0(%arg0: i32, %arg1: i32) -> (i32, i32) {
    %c0_i32 = arith.constant 0 : i32
    %c0_i32_0 = arith.constant 0 : i32
    return %arg0, %c0_i32 : i32, i32
  }
  func.func @transform_1(%arg0: i32, %arg1: i32) -> (i32, i32) {
    %c0_i32 = arith.constant 0 : i32
    %c0_i32_0 = arith.constant 0 : i32
    return %c0_i32, %arg1 : i32, i32
  }
  func.func @transform_2(%arg0: i32, %arg1: i32) -> (i32, i32) {
    %c0_i32 = arith.constant 0 : i32
    %c0_i32_0 = arith.constant 0 : i32
    return %c0_i32, %arg1 : i32, i32
  }
  func.func @transform_3(%arg0: i32, %arg1: i32) -> (i32, i32) {
    %c0_i32 = arith.constant 0 : i32
    return %arg0, %arg1 : i32, i32
  }
}

</mosaic_0001>

<llo_original>
// kernel: tpu_custom_call.1
$region0: #{tpu_custom_call.1}
  #allocation0 [shape = 'u32[]', space=smem, size = 0x4, offset = 0x4, fixed_abs, tag = 'smem constant byte address 0x4 - core index']
  #allocation1 [shape = 'u32[72,128]{1,0:T(1,128)}', space=vmem, size = 0x9000, scoped, tag = 'internal scratch']
  %s0 = inlined_call_operand.hbm [shape: f32[8,32], index: 0, kind: input, shape index: {}]
  %s1 = inlined_call_operand.hbm [shape: f32[32,32], index: 1, kind: input, shape index: {}]
  %s2 = inlined_call_operand.vmem [shape: f32[1,32], index: 2, kind: input, shape index: {}]
  %s3 = inlined_call_operand.hbm [shape: f32[8,32], index: 3, kind: output, shape index: {}]
  %s4 = sld [smem:[#allocation0]]
  $region30: #{tpu_custom_call.1} parent=0
    _
  %s6 = ssub.s32 1, %s4
  %s7 = scalar_select 0, %s6, %s4
  $region1: #{tpu_custom_call.1} parent=0
    #allocation2 [shape = 'u8[4096]{0}', space=vmem, size = 0x1000, scoped, tag = 'input window, operand 0, single buffered']
    #allocation3 [shape = 's32[1]{0}', space=sflag, size = 0x4, scoped, tag = 'scoped memory for tpu_custom_call.1']
    #allocation4 [shape = 's32[1]{0}', space=sflag, size = 0x4, scoped, tag = 'scoped memory for tpu_custom_call.1']
    #allocation5 [shape = 'u8[16384]{0}', space=vmem, size = 0x4000, scoped, tag = 'input window, operand 1, single buffered']
    #allocation6 [shape = 's32[1]{0}', space=sflag, size = 0x4, scoped, tag = 'scoped memory for tpu_custom_call.1']
    #allocation7 [shape = 'u8[4096]{0}', space=vmem, size = 0x1000, scoped, tag = 'output window, operand 0, single buffered']
    %8 = vsyncpa [#allocation3], 0
    %9 = vsyncpa [#allocation6], 0
    %10 = vsyncpa [#allocation4], 0
    // Predicated region
    $region2: #{tpu_custom_call.1} parent=1 // pred_check
      _
    $region3: #{tpu_custom_call.1} parent=1 // pred_check_branch
      %12 = sbr.rel (0) target = $region5
    $region4: #{tpu_custom_call.1} parent=1 // pred_region
      %14 = vsyncadd [#allocation3], 0
      %s16 = sshll.u32 %s0, 4
      %s17 = int_to_ptr.hbm [resolvable:$true] %s16
      %s18 = sshll.u32 [#allocation2], 4
      %s19 = int_to_ptr.vmem [resolvable:$true] %s18
      %21 = dma.hbm_to_vmem [thread:$0]  %s17, 128, %s19, [#allocation3]
    $region5: #{tpu_custom_call.1} parent=1 // pred_fallthru
      _
    // Predicated region
    $region6: #{tpu_custom_call.1} parent=1 // pred_check
      _
    $region7: #{tpu_custom_call.1} parent=1 // pred_check_branch
      %23 = sbr.rel (0) target = $region9
    $region8: #{tpu_custom_call.1} parent=1 // pred_region
      %25 = vsyncadd [#allocation6], 0
      %s26 = sshll.u32 %s1, 4
      %s27 = int_to_ptr.hbm [resolvable:$true] %s26
      %s28 = sshll.u32 [#allocation5], 4
      %s29 = int_to_ptr.vmem [resolvable:$true] %s28
      %34 = dma.hbm_to_vmem [thread:$0]  %s27, 512, %s29, [#allocation6], 128, 128, 8
    $region9: #{tpu_custom_call.1} parent=1 // pred_fallthru
      _
    // Predicated region
    $region10: #{tpu_custom_call.1} parent=1 // pred_check
      _
    $region11: #{tpu_custom_call.1} parent=1 // pred_check_branch
      %36 = sbr.rel (0) target = $region13
    $region12: #{tpu_custom_call.1} parent=1 // pred_region
      _
    $region13: #{tpu_custom_call.1} parent=1 // pred_fallthru
      _
    // Predicated region
    $region14: #{tpu_custom_call.1} parent=1 // pred_check
      _
    $region15: #{tpu_custom_call.1} parent=1 // pred_check_branch
      %38 = sbr.rel (0) target = $region17
    $region16: #{tpu_custom_call.1} parent=1 // pred_region
      %40 = dma.done [#allocation3], 128
    $region17: #{tpu_custom_call.1} parent=1 // pred_fallthru
      _
    // Predicated region
    $region18: #{tpu_custom_call.1} parent=1 // pred_check
      _
    $region19: #{tpu_custom_call.1} parent=1 // pred_check_branch
      %42 = sbr.rel (0) target = $region21
    $region20: #{tpu_custom_call.1} parent=1 // pred_region
      %44 = dma.done [#allocation6], 512
    $region21: #{tpu_custom_call.1} parent=1 // pred_fallthru
      _
    %v45 = vld [vmem:[#allocation2] sm:$0xff]
    %v46 = vld [vmem:[#allocation5] sm:$0xff]
    %v47 = vld [vmem:[#allocation5 + $0x8] sm:$0xff]
    %v48 = vld [vmem:[#allocation5 + $0x10] sm:$0xff]
    %v49 = vld [vmem:[#allocation5 + $0x18] sm:$0xff]
    %v50 = vld [vmem:[%s2] sm:$0x1]
    %v52 = vperm.slane %v50, 0
    %vm54 = vcmask 261120
    %v56 = vsel %vm54, %v45, 0
    %58 = vmatpush.msra.mxu0 0.0
    %59 = vmatpush.msra.mxu0 0.0
    %60 = vmatpush.msra.mxu0 0.0
    %61 = vmatpush.msra.mxu0 0.0
    %62 = vmatpush.msra.mxu0 0.0
    %63 = vmatpush.msra.mxu0 0.0
    %64 = vmatpush.msra.mxu0 0.0
    %65 = vmatpush.msra.mxu0 0.0
    %66 = vmatpush.msra.mxu0 0.0
    %67 = vmatpush.msra.mxu0 0.0
    %68 = vmatpush.msra.mxu0 0.0
    %69 = vmatpush.msra.mxu0 0.0
    %70 = vmatpush.msra.mxu0 %v49
    %71 = vmatpush.msra.mxu0 %v48
    %72 = vmatpush.msra.mxu0 %v47
    %73 = vmatpush.msra.mxu0 %v46
    %74 = vmatmul.f32.gmra.mxu0 %v56
    %v75 = vpop.f32.mrf.mxu0
    %v76 = vadd.f32 %v52, %v75
    %77 = vdwg.mxu0
    %v78 = vmul.f32 %v76, 0.5
    %79 = vst.msk [vmem:[#allocation7] sm:$0xff] %vm54, %v78
    // Predicated region
    $region22: #{tpu_custom_call.1} parent=1 // pred_check
      _
    $region23: #{tpu_custom_call.1} parent=1 // pred_check_branch
      %81 = sbr.rel (0) target = $region25
    $region24: #{tpu_custom_call.1} parent=1 // pred_region
      %83 = vsyncadd [#allocation4], 0
      %s85 = sshll.u32 [#allocation7], 4
      %s86 = int_to_ptr.vmem [resolvable:$true] %s85
      %s87 = sshll.u32 %s3, 4
      %s88 = int_to_ptr.hbm [resolvable:$true] %s87
      %90 = dma.vmem_to_hbm [thread:$0]  %s86, 128, %s88, [#allocation4]
    $region25: #{tpu_custom_call.1} parent=1 // pred_fallthru
      _
    // Predicated region
    $region26: #{tpu_custom_call.1} parent=1 // pred_check
      _
    $region27: #{tpu_custom_call.1} parent=1 // pred_check_branch
      %92 = sbr.rel (0) target = $region29
    $region28: #{tpu_custom_call.1} parent=1 // pred_region
      %94 = dma.done [#allocation4], 128
    $region29: #{tpu_custom_call.1} parent=1 // pred_fallthru
      _
    %95 = vsyncpa [#allocation3], 1
    %96 = vsyncpa [#allocation6], 1
    %97 = vsyncpa [#allocation4], 1

</llo_original>
